<compile_context>
chip_gen: v6e
topology: v6e:2x2x1
jax: 0.10.0
libtpu: 0.0.40
codegen_flags: <defaults>
</compile_context>

<pallas_src>
import functools

import jax
import jax.numpy as jnp
from jax.experimental import pallas as pl
from jax.experimental.pallas import tpu as pltpu


def _round_up(v, m):
    return (v + m - 1) // m * m


# ----------------------------- Pallas kernels ------------------------------ #

def _linear_single_k_kernel(x_ref, w_ref, b_ref, o_ref, *, activation):
    # x tile: (tm, K); W tile (PyTorch layout): (tn, K).  Contract last dims
    # of both -> (tm, tn); no materialized transpose, f32 MXU accumulate.
    y = jax.lax.dot_general(
        x_ref[...], w_ref[...],
        dimension_numbers=(((1,), (1,)), ((), ())),
        preferred_element_type=jnp.float32)
    y = y + b_ref[...].astype(jnp.float32)
    if activation == "relu":
        y = jnp.maximum(y, 0.0)
    o_ref[...] = y.astype(o_ref.dtype)


def _linear_multi_k_kernel(x_ref, w_ref, b_ref, o_ref, acc_ref, *, activation):
    k = pl.program_id(2)

    @pl.when(k == 0)
    def _():
        acc_ref[...] = jnp.zeros_like(acc_ref)

    acc_ref[...] += jax.lax.dot_general(
        x_ref[...], w_ref[...],
        dimension_numbers=(((1,), (1,)), ((), ())),
        preferred_element_type=jnp.float32)

    @pl.when(k == pl.num_programs(2) - 1)
    def _():
        y = acc_ref[...] + b_ref[...].astype(jnp.float32)
        if activation == "relu":
            y = jnp.maximum(y, 0.0)
        o_ref[...] = y.astype(o_ref.dtype)


# ----------------------------- Python wrapper ------------------------------ #

def linear_pallas(x, w, b, *, activation=None, compute_dtype=jnp.bfloat16,
                  out_dtype=None, tm_max=256, tn_max=256, tk_max=512):
    """y = act(x @ w.T + b) as a tiled Pallas TPU kernel.

    x: (M, K), w: (N, K) PyTorch-layout weight, b: (N,).
    """
    M, K = x.shape
    N, K2 = w.shape
    assert K == K2 and b.shape == (N,)
    out_dtype = out_dtype or x.dtype

    # Lane/sublane-friendly tiles (16 covers bf16 sublane packing, 128 lanes).
    tm = min(tm_max, _round_up(M, 16))
    tn = min(tn_max, _round_up(N, 128))
    tk = min(tk_max, _round_up(K, 128))
    Mp, Np, Kp = _round_up(M, tm), _round_up(N, tn), _round_up(K, tk)

    x_p = x if (Mp, Kp) == (M, K) else jnp.pad(x, ((0, Mp - M), (0, Kp - K)))
    w_p = w if (Np, Kp) == (N, K) else jnp.pad(w, ((0, Np - N), (0, Kp - K)))
    b_p = (b if Np == N else jnp.pad(b, (0, Np - N))).reshape(1, Np)

    # bf16 operands for the MXU; bias stays f32 for the f32 epilogue.
    x_p = x_p.astype(compute_dtype)
    w_p = w_p.astype(compute_dtype)
    b_p = b_p.astype(jnp.float32)

    nk = Kp // tk
    flops = 2 * M * K * N
    bytes_accessed = (x_p.size * x_p.dtype.itemsize
                      + w_p.size * w_p.dtype.itemsize
                      + b_p.size * b_p.dtype.itemsize
                      + Mp * Np * jnp.dtype(out_dtype).itemsize)
    cost = pl.CostEstimate(flops=flops, transcendentals=0,
                           bytes_accessed=bytes_accessed)

    if nk == 1:
        # Whole reduction fits in one tile: 2-D grid, no accumulator scratch,
        # dot + bias + activation fused straight into the output store.
        kernel = functools.partial(_linear_single_k_kernel, activation=activation)
        grid_spec = pltpu.PrefetchScalarGridSpec(
            num_scalar_prefetch=0,
            grid=(Mp // tm, Np // tn),
            in_specs=[
                pl.BlockSpec((tm, Kp), lambda i, j: (i, 0)),
                pl.BlockSpec((tn, Kp), lambda i, j: (j, 0)),
                pl.BlockSpec((1, tn), lambda i, j: (0, j)),
            ],
            out_specs=pl.BlockSpec((tm, tn), lambda i, j: (i, j)),
        )
        dim_sem = ("parallel", "parallel")
    else:
        kernel = functools.partial(_linear_multi_k_kernel, activation=activation)
        grid_spec = pltpu.PrefetchScalarGridSpec(
            num_scalar_prefetch=0,
            grid=(Mp // tm, Np // tn, nk),
            in_specs=[
                pl.BlockSpec((tm, tk), lambda i, j, k: (i, k)),
                # Weight tile index_map independent of the batch axis i.
                pl.BlockSpec((tn, tk), lambda i, j, k: (j, k)),
                pl.BlockSpec((1, tn), lambda i, j, k: (0, j)),
            ],
            out_specs=pl.BlockSpec((tm, tn), lambda i, j, k: (i, j)),
            scratch_shapes=[pltpu.VMEM((tm, tn), jnp.float32)],
        )
        dim_sem = ("parallel", "parallel", "arbitrary")

    out_p = pl.pallas_call(
        kernel,
        out_shape=jax.ShapeDtypeStruct((Mp, Np), out_dtype),
        grid_spec=grid_spec,
        compiler_params=pltpu.CompilerParams(
            dimension_semantics=dim_sem,
            vmem_limit_bytes=32 * 1024 * 1024,
        ),
        cost_estimate=cost,
    )(x_p, w_p, b_p)

    if (Mp, Np) != (M, N):
        out_p = out_p[:M, :N]
    return out_p


@functools.partial(jax.jit, static_argnames=("expand", "compute_dtype"))
def _fc_forward(x, params, *, expand, compute_dtype):
    if expand:
        w_new, b_new, w_fc, b_fc = params
        h = linear_pallas(x, w_new, b_new, activation="relu",
                          compute_dtype=compute_dtype)
        return linear_pallas(h, w_fc, b_fc, compute_dtype=compute_dtype)
    w_fc, b_fc = params
    return linear_pallas(x, w_fc, b_fc, compute_dtype=compute_dtype)


# --------------------------------- Module ----------------------------------- #

class FC:
    """JAX/Pallas port of the PyTorch FC module (Linear or Linear->ReLU->Linear)."""

    def __init__(self, input_dim, output_dim, expand_dim=0, stddev=None, key=None,
                 compute_dtype=jnp.bfloat16):
        self.expand_dim = expand_dim
        self.compute_dtype = compute_dtype
        if key is None:
            key = jax.random.PRNGKey(0)
        k1, k2, k3, k4 = jax.random.split(key, 4)

        def _init_linear(kw, kb, fan_in, fan_out):
            # PyTorch nn.Linear default init: U(-1/sqrt(fan_in), 1/sqrt(fan_in))
            bound = 1.0 / jnp.sqrt(jnp.float32(fan_in))
            w = jax.random.uniform(kw, (fan_out, fan_in), jnp.float32,
                                   minval=-bound, maxval=bound)
            b = jax.random.uniform(kb, (fan_out,), jnp.float32,
                                   minval=-bound, maxval=bound)
            return w, b

        if expand_dim > 0:
            self.w_new, self.b_new = _init_linear(k1, k2, input_dim, expand_dim)
            self.w_fc, self.b_fc = _init_linear(k3, k4, expand_dim, output_dim)
        else:
            self.w_fc, self.b_fc = _init_linear(k1, k2, input_dim, output_dim)
        # stddev is only an attribute annotation in the original module (no compute).
        self.stddev = stddev

    def __call__(self, x):
        if self.expand_dim > 0:
            params = (self.w_new, self.b_new, self.w_fc, self.b_fc)
            return _fc_forward(x, params, expand=True,
                               compute_dtype=self.compute_dtype)
        params = (self.w_fc, self.b_fc)
        return _fc_forward(x, params, expand=False,
                           compute_dtype=self.compute_dtype)


# ------------------------------------ main ---------------------------------- #

if __name__ == "__main__":
    key = jax.random.PRNGKey(0)
    kx, kx2, kparams, kparams2 = jax.random.split(key, 4)

    batch, input_dim, expand_dim, output_dim = 8, 32, 16, 8
    x = jax.random.normal(kx, (batch, input_dim), jnp.float32)

    # Case 1: expand_dim > 0  (Linear -> ReLU -> Linear)
    fc_expand = FC(input_dim, output_dim, expand_dim=expand_dim, stddev=0.01,
                   key=kparams)
    y_expand = jax.block_until_ready(fc_expand(x))
    ref_expand = jnp.maximum(x @ fc_expand.w_new.T + fc_expand.b_new, 0.0) \
                 @ fc_expand.w_fc.T + fc_expand.b_fc

    # Case 2: expand_dim == 0  (plain Linear)
    fc_plain = FC(input_dim, output_dim, expand_dim=0, key=kparams)
    y_plain = jax.block_until_ready(fc_plain(x))
    ref_plain = x @ fc_plain.w_fc.T + fc_plain.b_fc

    # Case 3: K larger than one reduction tile -> exercises the k-loop/accumulator.
    big_in = 1100
    x_big = jax.random.normal(kx2, (batch, big_in), jnp.float32)
    fc_big = FC(big_in, output_dim, expand_dim=0, key=kparams2)
    y_big = jax.block_until_ready(fc_big(x_big))
    ref_big = x_big @ fc_big.w_fc.T + fc_big.b_fc

    assert y_expand.shape == (batch, output_dim)
    assert y_plain.shape == (batch, output_dim)
    assert y_big.shape == (batch, output_dim)
    # bf16 MXU operands vs pure-f32 reference -> loose tolerance.
    assert jnp.allclose(y_expand, ref_expand, atol=5e-2, rtol=5e-2)
    assert jnp.allclose(y_plain, ref_plain, atol=5e-2, rtol=5e-2)
    assert jnp.allclose(y_big, ref_big, atol=5e-2, rtol=5e-2)

    print("KERNEL_OK")
</pallas_src>

<mosaic_0001>
module attributes {stable_mosaic.version = 11 : i64} {
  func.func @_linear_single_k_kernel(%arg0: i32, %arg1: i32, %arg2: memref<16x128xbf16, #tpu.memory_space<vmem>>, %arg3: memref<128x128xbf16, #tpu.memory_space<vmem>>, %arg4: memref<1x128xf32, #tpu.memory_space<vmem>>, %arg5: memref<16x128xf32, #tpu.memory_space<vmem>>) attributes {dimension_semantics = [#tpu.dimension_semantics<parallel>, #tpu.dimension_semantics<parallel>], iteration_bounds = array<i64: 1, 1>, scalar_prefetch = 0 : i64, scratch_operands = 0 : i64, tpu.core_type = #tpu.core_type<tc>, window_params = [{transform_indices = @transform_0, window_bounds = array<i64: 16, 128>}, {transform_indices = @transform_1, window_bounds = array<i64: 128, 128>}, {transform_indices = @transform_2, window_bounds = array<i64: 1, 128>}, {transform_indices = @transform_3, window_bounds = array<i64: 16, 128>}]} {
    %c0 = arith.constant 0 : index
    %c0_0 = arith.constant 0 : index
    %0 = vector.load %arg2[%c0, %c0_0] : memref<16x128xbf16, #tpu.memory_space<vmem>>, vector<16x128xbf16>
    %c0_1 = arith.constant 0 : index
    %c0_2 = arith.constant 0 : index
    %1 = vector.load %arg3[%c0_1, %c0_2] : memref<128x128xbf16, #tpu.memory_space<vmem>>, vector<128x128xbf16>
    %cst = arith.constant dense<0.000000e+00> : vector<16x128xf32>
    %2 = tpu.matmul %0, %1, %cst {dimension_numbers = #tpu.dot_dimension_numbers<[1], [1], [0], [0], [0, 0, 1, 0], [], []>} : vector<16x128xbf16>, vector<128x128xbf16>, vector<16x128xf32> -> vector<16x128xf32>
    %c0_3 = arith.constant 0 : index
    %c0_4 = arith.constant 0 : index
    %3 = vector.load %arg4[%c0_3, %c0_4] : memref<1x128xf32, #tpu.memory_space<vmem>>, vector<1x128xf32>
    %4 = vector.broadcast %3 : vector<1x128xf32> to vector<16x128xf32>
    %5 = arith.addf %2, %4 : vector<16x128xf32>
    %cst_5 = arith.constant 0.000000e+00 : f32
    %6 = vector.broadcast %cst_5 : f32 to vector<16x128xf32>
    %7 = arith.maximumf %5, %6 : vector<16x128xf32>
    %c0_6 = arith.constant 0 : index
    %c0_7 = arith.constant 0 : index
    %8 = vector.load %arg5[%c0_6, %c0_7] : memref<16x128xf32, #tpu.memory_space<vmem>>, vector<16x128xf32>
    tpu.vector_store %arg5[%c0_6, %c0_7], %7 {strides = array<i32>} : memref<16x128xf32, #tpu.memory_space<vmem>>, vector<16x128xf32>,
    return
  }
  func.func @transform_0(%arg0: i32, %arg1: i32) -> (i32, i32) {
    %c0_i32 = arith.constant 0 : i32
    %c0_i32_0 = arith.constant 0 : i32
    return %arg0, %c0_i32 : i32, i32
  }
  func.func @transform_1(%arg0: i32, %arg1: i32) -> (i32, i32) {
    %c0_i32 = arith.constant 0 : i32
    %c0_i32_0 = arith.constant 0 : i32
    return %arg1, %c0_i32 : i32, i32
  }
  func.func @transform_2(%arg0: i32, %arg1: i32) -> (i32, i32) {
    %c0_i32 = arith.constant 0 : i32
    %c0_i32_0 = arith.constant 0 : i32
    return %c0_i32, %arg1 : i32, i32
  }
  func.func @transform_3(%arg0: i32, %arg1: i32) -> (i32, i32) {
    %c0_i32 = arith.constant 0 : i32
    return %arg0, %arg1 : i32, i32
  }
}

module attributes {stable_mosaic.version = 11 : i64} {
  func.func @_linear_single_k_kernel(%arg0: i32, %arg1: i32, %arg2: memref<16x128xbf16, #tpu.memory_space<vmem>>, %arg3: memref<128x128xbf16, #tpu.memory_space<vmem>>, %arg4: memref<1x128xf32, #tpu.memory_space<vmem>>, %arg5: memref<16x128xf32, #tpu.memory_space<vmem>>) attributes {dimension_semantics = [#tpu.dimension_semantics<parallel>, #tpu.dimension_semantics<parallel>], iteration_bounds = array<i64: 1, 1>, scalar_prefetch = 0 : i64, scratch_operands = 0 : i64, tpu.core_type = #tpu.core_type<tc>, window_params = [{transform_indices = @transform_0, window_bounds = array<i64: 16, 128>}, {transform_indices = @transform_1, window_bounds = array<i64: 128, 128>}, {transform_indices = @transform_2, window_bounds = array<i64: 1, 128>}, {transform_indices = @transform_3, window_bounds = array<i64: 16, 128>}]} {
    %c0 = arith.constant 0 : index
    %c0_0 = arith.constant 0 : index
    %0 = vector.load %arg2[%c0, %c0_0] : memref<16x128xbf16, #tpu.memory_space<vmem>>, vector<16x128xbf16>
    %c0_1 = arith.constant 0 : index
    %c0_2 = arith.constant 0 : index
    %1 = vector.load %arg3[%c0_1, %c0_2] : memref<128x128xbf16, #tpu.memory_space<vmem>>, vector<128x128xbf16>
    %cst = arith.constant dense<0.000000e+00> : vector<16x128xf32>
    %2 = tpu.matmul %0, %1, %cst {dimension_numbers = #tpu.dot_dimension_numbers<[1], [1], [0], [0], [0, 0, 1, 0], [], []>} : vector<16x128xbf16>, vector<128x128xbf16>, vector<16x128xf32> -> vector<16x128xf32>
    %c0_3 = arith.constant 0 : index
    %c0_4 = arith.constant 0 : index
    %3 = vector.load %arg4[%c0_3, %c0_4] : memref<1x128xf32, #tpu.memory_space<vmem>>, vector<1x128xf32>
    %4 = vector.broadcast %3 : vector<1x128xf32> to vector<16x128xf32>
    %5 = arith.addf %2, %4 : vector<16x128xf32>
    %c0_5 = arith.constant 0 : index
    %c0_6 = arith.constant 0 : index
    %6 = vector.load %arg5[%c0_5, %c0_6] : memref<16x128xf32, #tpu.memory_space<vmem>>, vector<16x128xf32>
    tpu.vector_store %arg5[%c0_5, %c0_6], %5 {strides = array<i32>} : memref<16x128xf32, #tpu.memory_space<vmem>>, vector<16x128xf32>,
    return
  }
  func.func @transform_0(%arg0: i32, %arg1: i32) -> (i32, i32) {
    %c0_i32 = arith.constant 0 : i32
    %c0_i32_0 = arith.constant 0 : i32
    return %arg0, %c0_i32 : i32, i32
  }
  func.func @transform_1(%arg0: i32, %arg1: i32) -> (i32, i32) {
    %c0_i32 = arith.constant 0 : i32
    %c0_i32_0 = arith.constant 0 : i32
    return %arg1, %c0_i32 : i32, i32
  }
  func.func @transform_2(%arg0: i32, %arg1: i32) -> (i32, i32) {
    %c0_i32 = arith.constant 0 : i32
    %c0_i32_0 = arith.constant 0 : i32
    return %c0_i32, %arg1 : i32, i32
  }
  func.func @transform_3(%arg0: i32, %arg1: i32) -> (i32, i32) {
    %c0_i32 = arith.constant 0 : i32
    return %arg0, %arg1 : i32, i32
  }
}

</mosaic_0001>

<llo_original>
// kernel: _fc_forward.3
$region0: #{_fc_forward.3}
  #allocation0 [shape = 'u32[]', space=smem, size = 0x4, offset = 0x4, fixed_abs, tag = 'smem constant byte address 0x4 - core index']
  #allocation1 [shape = 'u32[144,128]{1,0:T(1,128)}', space=vmem, size = 0x12000, scoped, tag = 'internal scratch']
  %s0 = inlined_call_operand.vmem [shape: bf16[16,128], index: 0, kind: input, shape index: {}]
  %s1 = inlined_call_operand.vmem [shape: bf16[128,128], index: 1, kind: input, shape index: {}]
  %s2 = inlined_call_operand.vmem [shape: f32[1,128], index: 2, kind: input, shape index: {}]
  %s3 = inlined_call_operand.vmem [shape: f32[16,128], index: 3, kind: output, shape index: {}]
  %s4 = sld [smem:[#allocation0]]
  $region22: #{_fc_forward.3} parent=0
    _
  %s6 = ssub.s32 1, %s4
  %s7 = scalar_select 0, %s6, %s4
  // Predicated region
  $region2: #{_fc_forward.3} parent=0 // pred_check
    _
  $region3: #{_fc_forward.3} parent=0 // pred_check_branch
    %9 = sbr.rel (0) target = $region5
  $region4: #{_fc_forward.3} parent=0 // pred_region
    _
  $region5: #{_fc_forward.3} parent=0 // pred_fallthru
    _
  // Predicated region
  $region6: #{_fc_forward.3} parent=0 // pred_check
    _
  $region7: #{_fc_forward.3} parent=0 // pred_check_branch
    %11 = sbr.rel (0) target = $region9
  $region8: #{_fc_forward.3} parent=0 // pred_region
    _
  $region9: #{_fc_forward.3} parent=0 // pred_fallthru
    _
  // Predicated region
  $region10: #{_fc_forward.3} parent=0 // pred_check
    _
  $region11: #{_fc_forward.3} parent=0 // pred_check_branch
    %13 = sbr.rel (0) target = $region13
  $region12: #{_fc_forward.3} parent=0 // pred_region
    _
  $region13: #{_fc_forward.3} parent=0 // pred_fallthru
    _
  %v15 = vld [vmem:[%s0] sm:$0xf]
  %v16 = vld [vmem:[%s0 + $0x4] sm:$0xf]
  %v17 = vld [vmem:[%s1] sm:$0xf]
  %v18 = vld [vmem:[%s1 + $0x4] sm:$0xf]
  %v19 = vld [vmem:[%s1 + $0x8] sm:$0xf]
  %v20 = vld [vmem:[%s1 + $0xc] sm:$0xf]
  %v21 = vld [vmem:[%s1 + $0x10] sm:$0xf]
  %v22 = vld [vmem:[%s1 + $0x14] sm:$0xf]
  %v23 = vld [vmem:[%s1 + $0x18] sm:$0xf]
  %v24 = vld [vmem:[%s1 + $0x1c] sm:$0xf]
  %v25 = vld [vmem:[%s1 + $0x20] sm:$0xf]
  %v26 = vld [vmem:[%s1 + $0x24] sm:$0xf]
  %v27 = vld [vmem:[%s1 + $0x28] sm:$0xf]
  %v28 = vld [vmem:[%s1 + $0x2c] sm:$0xf]
  %v29 = vld [vmem:[%s1 + $0x30] sm:$0xf]
  %v30 = vld [vmem:[%s1 + $0x34] sm:$0xf]
  %v31 = vld [vmem:[%s1 + $0x38] sm:$0xf]
  %v32 = vld [vmem:[%s1 + $0x3c] sm:$0xf]
  %v33 = vld [vmem:[%s2] sm:$0x1]
  %v35 = vlaneseq
  %v36 = vshrl.u32 %v35, 7
  %v37 = vsub.s32 0, %v36
  %v38 = vrot.slane %v33, %v37
  %v42 = vunpack.c.l.b16 %v15
  %v43 = vunpack.c.l.b16 %v16
  %v44 = vpack.c.b16 %v43, %v42
  %v62 = vunpack.c.l.b16 %v17
  %v63 = vunpack.c.l.b16 %v18
  %v64 = vunpack.c.l.b16 %v19
  %v65 = vunpack.c.l.b16 %v20
  %v66 = vunpack.c.l.b16 %v21
  %v67 = vunpack.c.l.b16 %v22
  %v68 = vunpack.c.l.b16 %v23
  %v69 = vunpack.c.l.b16 %v24
  %v70 = vunpack.c.l.b16 %v25
  %v71 = vunpack.c.l.b16 %v26
  %v72 = vunpack.c.l.b16 %v27
  %v73 = vunpack.c.l.b16 %v28
  %v74 = vunpack.c.l.b16 %v29
  %v75 = vunpack.c.l.b16 %v30
  %v76 = vunpack.c.l.b16 %v31
  %v77 = vunpack.c.l.b16 %v32
  %v78 = vpack.c.b16 %v63, %v62
  %v79 = vpack.c.b16 %v65, %v64
  %v80 = vpack.c.b16 %v67, %v66
  %v81 = vpack.c.b16 %v69, %v68
  %v82 = vpack.c.b16 %v71, %v70
  %v83 = vpack.c.b16 %v73, %v72
  %v84 = vpack.c.b16 %v75, %v74
  %v85 = vpack.c.b16 %v77, %v76
  %94 = vmatprep.subr.bf16.mxu0 0
  %95 = vmatpush1.bf16.xpose.msra.mxu0 %v85
  %96 = vmatprep.subr.bf16.mxu0 0
  %97 = vmatpush1.bf16.xpose.msra.mxu0 %v84
  %98 = vmatprep.subr.bf16.mxu0 0
  %99 = vmatpush1.bf16.xpose.msra.mxu0 %v83
  %100 = vmatprep.subr.bf16.mxu0 0
  %101 = vmatpush1.bf16.xpose.msra.mxu0 %v82
  %102 = vmatprep.subr.bf16.mxu0 0
  %103 = vmatpush1.bf16.xpose.msra.mxu0 %v81
  %104 = vmatprep.subr.bf16.mxu0 0
  %105 = vmatpush1.bf16.xpose.msra.mxu0 %v80
  %106 = vmatprep.subr.bf16.mxu0 0
  %107 = vmatpush1.bf16.xpose.msra.mxu0 %v79
  %108 = vmatprep.subr.bf16.mxu0 0
  %109 = vmatpush1.bf16.xpose.msra.mxu0 %v78
  %110 = vmatprep.subr.bf16.mxu0 0
  %111 = vmatpush2.bf16.xpose.msra.mxu0 0
  %112 = vmatprep.subr.bf16.mxu0 0
  %113 = vmatpush2.bf16.xpose.msra.mxu0 0
  %114 = vmatprep.subr.bf16.mxu0 0
  %115 = vmatpush2.bf16.xpose.msra.mxu0 0
  %116 = vmatprep.subr.bf16.mxu0 0
  %117 = vmatpush2.bf16.xpose.msra.mxu0 0
  %118 = vmatprep.subr.bf16.mxu0 0
  %119 = vmatpush2.bf16.xpose.msra.mxu0 0
  %120 = vmatprep.subr.bf16.mxu0 0
  %121 = vmatpush2.bf16.xpose.msra.mxu0 0
  %122 = vmatprep.subr.bf16.mxu0 0
  %123 = vmatpush2.bf16.xpose.msra.mxu0 0
  %124 = vmatprep.subr.bf16.mxu0 0
  %125 = vmatpush2.bf16.xpose.msra.mxu0 0
  %126 = vmatprep.mubr.bf16.mxu0 0
  %127 = vmatmul.mubr.bf16.gmra.mxu0 %v44
  %v128 = vpop.f32.mrf.mxu0
  %v129 = vadd.f32 %v38, %v128
  %v130 = vpop.f32.mrf.mxu0
  %v131 = vpop.f32.mrf.mxu0
  %v132 = vadd.f32 %v38, %v131
  %v133 = vpop.f32.mrf.mxu0
  %134 = vdwg.mxu0
  %135 = vst [vmem:[%s3] sm:$0xff] %v129
  %136 = vst [vmem:[%s3 + $0x8] sm:$0xff] %v132
  // Predicated region
  $region14: #{_fc_forward.3} parent=0 // pred_check
    _
  $region15: #{_fc_forward.3} parent=0 // pred_check_branch
    %138 = sbr.rel (0) target = $region17
  $region16: #{_fc_forward.3} parent=0 // pred_region
    _
  $region17: #{_fc_forward.3} parent=0 // pred_fallthru
    _
  // Predicated region
  $region18: #{_fc_forward.3} parent=0 // pred_check
    _
  $region19: #{_fc_forward.3} parent=0 // pred_check_branch
    %140 = sbr.rel (0) target = $region21
  $region20: #{_fc_forward.3} parent=0 // pred_region
    _
  $region21: #{_fc_forward.3} parent=0 // pred_fallthru
    _

// kernel: _fc_forward.2
$region0: #{_fc_forward.2}
  #allocation0 [shape = 'u32[]', space=smem, size = 0x4, offset = 0x4, fixed_abs, tag = 'smem constant byte address 0x4 - core index']
  #allocation1 [shape = 'u32[144,128]{1,0:T(1,128)}', space=vmem, size = 0x12000, scoped, tag = 'internal scratch']
  %s0 = inlined_call_operand.vmem [shape: bf16[16,128], index: 0, kind: input, shape index: {}]
  %s1 = inlined_call_operand.vmem [shape: bf16[128,128], index: 1, kind: input, shape index: {}]
  %s2 = inlined_call_operand.vmem [shape: f32[1,128], index: 2, kind: input, shape index: {}]
  %s3 = inlined_call_operand.vmem [shape: f32[16,128], index: 3, kind: output, shape index: {}]
  %s4 = sld [smem:[#allocation0]]
  $region22: #{_fc_forward.2} parent=0
    _
  %s6 = ssub.s32 1, %s4
  %s7 = scalar_select 0, %s6, %s4
  // Predicated region
  $region2: #{_fc_forward.2} parent=0 // pred_check
    _
  $region3: #{_fc_forward.2} parent=0 // pred_check_branch
    %9 = sbr.rel (0) target = $region5
  $region4: #{_fc_forward.2} parent=0 // pred_region
    _
  $region5: #{_fc_forward.2} parent=0 // pred_fallthru
    _
  // Predicated region
  $region6: #{_fc_forward.2} parent=0 // pred_check
    _
  $region7: #{_fc_forward.2} parent=0 // pred_check_branch
    %11 = sbr.rel (0) target = $region9
  $region8: #{_fc_forward.2} parent=0 // pred_region
    _
  $region9: #{_fc_forward.2} parent=0 // pred_fallthru
    _
  // Predicated region
  $region10: #{_fc_forward.2} parent=0 // pred_check
    _
  $region11: #{_fc_forward.2} parent=0 // pred_check_branch
    %13 = sbr.rel (0) target = $region13
  $region12: #{_fc_forward.2} parent=0 // pred_region
    _
  $region13: #{_fc_forward.2} parent=0 // pred_fallthru
    _
  %v15 = vld [vmem:[%s0] sm:$0xf]
  %v16 = vld [vmem:[%s0 + $0x4] sm:$0xf]
  %v17 = vld [vmem:[%s1] sm:$0xf]
  %v18 = vld [vmem:[%s1 + $0x4] sm:$0xf]
  %v19 = vld [vmem:[%s1 + $0x8] sm:$0xf]
  %v20 = vld [vmem:[%s1 + $0xc] sm:$0xf]
  %v21 = vld [vmem:[%s1 + $0x10] sm:$0xf]
  %v22 = vld [vmem:[%s1 + $0x14] sm:$0xf]
  %v23 = vld [vmem:[%s1 + $0x18] sm:$0xf]
  %v24 = vld [vmem:[%s1 + $0x1c] sm:$0xf]
  %v25 = vld [vmem:[%s1 + $0x20] sm:$0xf]
  %v26 = vld [vmem:[%s1 + $0x24] sm:$0xf]
  %v27 = vld [vmem:[%s1 + $0x28] sm:$0xf]
  %v28 = vld [vmem:[%s1 + $0x2c] sm:$0xf]
  %v29 = vld [vmem:[%s1 + $0x30] sm:$0xf]
  %v30 = vld [vmem:[%s1 + $0x34] sm:$0xf]
  %v31 = vld [vmem:[%s1 + $0x38] sm:$0xf]
  %v32 = vld [vmem:[%s1 + $0x3c] sm:$0xf]
  %v33 = vld [vmem:[%s2] sm:$0x1]
  %v35 = vlaneseq
  %v36 = vshrl.u32 %v35, 7
  %v37 = vsub.s32 0, %v36
  %v38 = vrot.slane %v33, %v37
  %v42 = vunpack.c.l.b16 %v15
  %v43 = vunpack.c.l.b16 %v16
  %v44 = vpack.c.b16 %v43, %v42
  %v62 = vunpack.c.l.b16 %v17
  %v63 = vunpack.c.l.b16 %v18
  %v64 = vunpack.c.l.b16 %v19
  %v65 = vunpack.c.l.b16 %v20
  %v66 = vunpack.c.l.b16 %v21
  %v67 = vunpack.c.l.b16 %v22
  %v68 = vunpack.c.l.b16 %v23
  %v69 = vunpack.c.l.b16 %v24
  %v70 = vunpack.c.l.b16 %v25
  %v71 = vunpack.c.l.b16 %v26
  %v72 = vunpack.c.l.b16 %v27
  %v73 = vunpack.c.l.b16 %v28
  %v74 = vunpack.c.l.b16 %v29
  %v75 = vunpack.c.l.b16 %v30
  %v76 = vunpack.c.l.b16 %v31
  %v77 = vunpack.c.l.b16 %v32
  %v78 = vpack.c.b16 %v63, %v62
  %v79 = vpack.c.b16 %v65, %v64
  %v80 = vpack.c.b16 %v67, %v66
  %v81 = vpack.c.b16 %v69, %v68
  %v82 = vpack.c.b16 %v71, %v70
  %v83 = vpack.c.b16 %v73, %v72
  %v84 = vpack.c.b16 %v75, %v74
  %v85 = vpack.c.b16 %v77, %v76
  %94 = vmatprep.subr.bf16.mxu0 0
  %95 = vmatpush1.bf16.xpose.msra.mxu0 %v85
  %96 = vmatprep.subr.bf16.mxu0 0
  %97 = vmatpush1.bf16.xpose.msra.mxu0 %v84
  %98 = vmatprep.subr.bf16.mxu0 0
  %99 = vmatpush1.bf16.xpose.msra.mxu0 %v83
  %100 = vmatprep.subr.bf16.mxu0 0
  %101 = vmatpush1.bf16.xpose.msra.mxu0 %v82
  %102 = vmatprep.subr.bf16.mxu0 0
  %103 = vmatpush1.bf16.xpose.msra.mxu0 %v81
  %104 = vmatprep.subr.bf16.mxu0 0
  %105 = vmatpush1.bf16.xpose.msra.mxu0 %v80
  %106 = vmatprep.subr.bf16.mxu0 0
  %107 = vmatpush1.bf16.xpose.msra.mxu0 %v79
  %108 = vmatprep.subr.bf16.mxu0 0
  %109 = vmatpush1.bf16.xpose.msra.mxu0 %v78
  %110 = vmatprep.subr.bf16.mxu0 0
  %111 = vmatpush2.bf16.xpose.msra.mxu0 0
  %112 = vmatprep.subr.bf16.mxu0 0
  %113 = vmatpush2.bf16.xpose.msra.mxu0 0
  %114 = vmatprep.subr.bf16.mxu0 0
  %115 = vmatpush2.bf16.xpose.msra.mxu0 0
  %116 = vmatprep.subr.bf16.mxu0 0
  %117 = vmatpush2.bf16.xpose.msra.mxu0 0
  %118 = vmatprep.subr.bf16.mxu0 0
  %119 = vmatpush2.bf16.xpose.msra.mxu0 0
  %120 = vmatprep.subr.bf16.mxu0 0
  %121 = vmatpush2.bf16.xpose.msra.mxu0 0
  %122 = vmatprep.subr.bf16.mxu0 0
  %123 = vmatpush2.bf16.xpose.msra.mxu0 0
  %124 = vmatprep.subr.bf16.mxu0 0
  %125 = vmatpush2.bf16.xpose.msra.mxu0 0
  %126 = vmatprep.mubr.bf16.mxu0 0
  %127 = vmatmul.mubr.bf16.gmra.mxu0 %v44
  %v128 = vpop.f32.mrf.mxu0
  %v129 = vadd.f32 %v38, %v128
  %v130 = vpop.f32.mrf.mxu0
  %v131 = vpop.f32.mrf.mxu0
  %v132 = vadd.f32 %v38, %v131
  %v133 = vpop.f32.mrf.mxu0
  %134 = vdwg.mxu0
  %v135 = vmax.f32 %v129, 0.0
  %v136 = vmax.f32 %v132, 0.0
  %137 = vst [vmem:[%s3] sm:$0xff] %v135
  %138 = vst [vmem:[%s3 + $0x8] sm:$0xff] %v136
  // Predicated region
  $region14: #{_fc_forward.2} parent=0 // pred_check
    _
  $region15: #{_fc_forward.2} parent=0 // pred_check_branch
    %140 = sbr.rel (0) target = $region17
  $region16: #{_fc_forward.2} parent=0 // pred_region
    _
  $region17: #{_fc_forward.2} parent=0 // pred_fallthru
    _
  // Predicated region
  $region18: #{_fc_forward.2} parent=0 // pred_check
    _
  $region19: #{_fc_forward.2} parent=0 // pred_check_branch
    %142 = sbr.rel (0) target = $region21
  $region20: #{_fc_forward.2} parent=0 // pred_region
    _
  $region21: #{_fc_forward.2} parent=0 // pred_fallthru
    _

</llo_original>
